<compile_context>
chip_gen: v5e
topology: v5e:2x2
jax: 0.10.0
libtpu: 0.0.40
codegen_flags: <defaults>
</compile_context>

<pallas_src>
import functools

import jax
import jax.numpy as jnp
from jax.experimental import pallas as pl
from jax.experimental.pallas import tpu as pltpu


def _swish(x):
    # x * sigmoid(x), with sigmoid(x) = 0.5*(tanh(x/2)+1): one EUP transcendental per
    # element on all TPU generations. Runs in the dtype of x (bf16 in the hot path).
    return 0.5 * x * (jnp.tanh(0.5 * x) + 1.0)


def mlp_kernel(x_ref, w1_ref, b1_ref, w2_ref, b2_ref, w3_ref, b3_ref,
               w4_ref, b4_ref, o_ref):
    # Hoist f32 bias reads/broadcasts out of the hot expression chain.
    b1 = b1_ref[...]
    b2 = b2_ref[...]
    b3 = b3_ref[...]
    b4 = b4_ref[...]

    # x arrives as f32 (single HBM pass); cast to bf16 in-kernel right before the
    # first MXU op (cheap VPU work hidden under MXU/EUP slack).
    x = x_ref[...].astype(jnp.bfloat16)

    # bf16 MXU operands with f32 accumulation + f32 bias add; bf16 swish feeds the
    # next dot directly (no separate pre-matmul cast).
    h = jnp.dot(x, w1_ref[...], preferred_element_type=jnp.float32) + b1
    h = _swish(h.astype(jnp.bfloat16))
    h = jnp.dot(h, w2_ref[...], preferred_element_type=jnp.float32) + b2
    h = _swish(h.astype(jnp.bfloat16))
    h = jnp.dot(h, w3_ref[...], preferred_element_type=jnp.float32) + b3
    h = _swish(h.astype(jnp.bfloat16))
    h = jnp.dot(h, w4_ref[...], preferred_element_type=jnp.float32) + b4
    o_ref[...] = h.astype(o_ref.dtype)


def _round_up(x, m):
    return ((x + m - 1) // m) * m


@functools.partial(jax.jit, static_argnames=("block_b",))
def discritor_code_forward(x, params, block_b=2048):
    """x: [B, infeat_dim] float32.
    params: dict name -> (w [in,out] bf16, b [1,out] f32), see prepare_params()."""
    B, D = x.shape
    w1, b1 = params["fc1"]
    w2, b2 = params["fc2"]
    w3, b3 = params["fc3"]
    w4, b4 = params["fc4"]
    out_dim = w4.shape[1]

    # Batch tile selection:
    #  * large (default 2048) to amortize per-grid-step overhead,
    #  * never more than ceil(B/2) rounded to a multiple of 8, so there are >= 2
    #    "parallel" steps (megacore sharding on v7x; harmless on single-TC v5e/v6e),
    #  * capped so 2x-buffered f32 x tiles + f32 intermediates stay well inside every
    #    generation's scoped-VMEM defaults even for large infeat_dim.
    if B <= 8:
        bb = B
    else:
        bb = min(block_b, _round_up(pl.cdiv(B, 2), 8))
        per_row_bytes = (2 * D + 8 * 128) * 4  # 2x-buffered f32 x row + intermediates
        bb_cap = max(8, ((12 * 1024 * 1024) // per_row_bytes) // 8 * 8)
        bb = max(8, min(bb, bb_cap))
    grid = (pl.cdiv(B, bb),)

    def full_spec(shape):
        # Weights / biases: same resident block for every batch tile (DMA'd once).
        return pl.BlockSpec(shape, lambda i: tuple(0 for _ in shape))

    return pl.pallas_call(
        mlp_kernel,
        out_shape=jax.ShapeDtypeStruct((B, out_dim), jnp.float32),
        grid_spec=pltpu.PrefetchScalarGridSpec(
            num_scalar_prefetch=0,
            grid=grid,
            in_specs=[
                pl.BlockSpec((bb, D), lambda i: (i, 0)),   # x tile (f32, cast in kernel)
                full_spec(w1.shape), full_spec(b1.shape),
                full_spec(w2.shape), full_spec(b2.shape),
                full_spec(w3.shape), full_spec(b3.shape),
                full_spec(w4.shape), full_spec(b4.shape),
            ],
            out_specs=pl.BlockSpec((bb, out_dim), lambda i: (i, 0)),
        ),
        compiler_params=pltpu.CompilerParams(
            dimension_semantics=("parallel",),
            vmem_limit_bytes=32 * 1024 * 1024,
        ),
    )(x, w1, b1, w2, b2, w3, b3, w4, b4)


def init_params(key, infeat_dim):
    """nn.Linear-style init (uniform +-1/sqrt(fan_in)), f32.
    Weights stored [in, out] (torch weight transposed); biases [1, out]."""
    dims = [(infeat_dim, 128), (128, 128), (128, 64), (64, 2)]
    names = ["fc1", "fc2", "fc3", "fc4"]
    params = {}
    for name, (fan_in, fan_out) in zip(names, dims):
        key, kw, kb = jax.random.split(key, 3)
        bound = 1.0 / (fan_in ** 0.5)
        w = jax.random.uniform(kw, (fan_in, fan_out), jnp.float32, -bound, bound)
        b = jax.random.uniform(kb, (1, fan_out), jnp.float32, -bound, bound)
        params[name] = (w, b)
    return params


def prepare_params(params_f32):
    """One-time cast of weights to bf16 for the MXU (outside the jitted forward so
    per-call cast ops / HBM rewrites are removed). Biases stay f32."""
    return {name: (w.astype(jnp.bfloat16), b) for name, (w, b) in params_f32.items()}


def reference_forward(x, params_f32):
    # Pure f32 reference matching the PyTorch module.
    h = x
    for name in ["fc1", "fc2", "fc3"]:
        w, b = params_f32[name]
        h = h @ w + b
        h = h * jax.nn.sigmoid(h)
    w, b = params_f32["fc4"]
    return h @ w + b


if __name__ == "__main__":
    key = jax.random.PRNGKey(0)
    k_param, k_x, k_x2 = jax.random.split(key, 3)

    B, infeat_dim = 16, 32
    params_f32 = init_params(k_param, infeat_dim)
    params = prepare_params(params_f32)

    x = jax.random.normal(k_x, (B, infeat_dim), jnp.float32)
    out = jax.block_until_ready(discritor_code_forward(x, params))
    ref = reference_forward(x, params_f32)
    assert out.shape == (B, 2), out.shape
    # bf16 MXU operands + bf16 swish (f32 accumulation) -> loosened tolerance.
    assert jnp.allclose(out, ref, atol=1e-1, rtol=1e-1), "mismatch vs reference"

    # Non-multiple batch: exercises the partial edge tile / masked output write.
    B2 = 13
    x2 = jax.random.normal(k_x2, (B2, infeat_dim), jnp.float32)
    out2 = jax.block_until_ready(discritor_code_forward(x2, params))
    ref2 = reference_forward(x2, params_f32)
    assert out2.shape == (B2, 2), out2.shape
    assert jnp.allclose(out2, ref2, atol=1e-1, rtol=1e-1), "mismatch (partial tile)"

    print("KERNEL_OK")
</pallas_src>

<mosaic_0001>
module attributes {stable_mosaic.version = 11 : i64} {
  func.func @mlp_kernel(%arg0: i32, %arg1: memref<8x32xf32, #tpu.memory_space<vmem>>, %arg2: memref<32x128xbf16, #tpu.memory_space<vmem>>, %arg3: memref<1x128xf32, #tpu.memory_space<vmem>>, %arg4: memref<128x128xbf16, #tpu.memory_space<vmem>>, %arg5: memref<1x128xf32, #tpu.memory_space<vmem>>, %arg6: memref<128x64xbf16, #tpu.memory_space<vmem>>, %arg7: memref<1x64xf32, #tpu.memory_space<vmem>>, %arg8: memref<64x2xbf16, #tpu.memory_space<vmem>>, %arg9: memref<1x2xf32, #tpu.memory_space<vmem>>, %arg10: memref<8x2xf32, #tpu.memory_space<vmem>>) attributes {dimension_semantics = [#tpu.dimension_semantics<parallel>], iteration_bounds = array<i64: 2>, scalar_prefetch = 0 : i64, scratch_operands = 0 : i64, tpu.core_type = #tpu.core_type<tc>, window_params = [{transform_indices = @transform_0, window_bounds = array<i64: 8, 32>}, {pipeline_mode = #tpu.pipeline_mode<synchronous>, transform_indices = @transform_1, window_bounds = array<i64: 32, 128>}, {pipeline_mode = #tpu.pipeline_mode<synchronous>, transform_indices = @transform_2, window_bounds = array<i64: 1, 128>}, {pipeline_mode = #tpu.pipeline_mode<synchronous>, transform_indices = @transform_3, window_bounds = array<i64: 128, 128>}, {pipeline_mode = #tpu.pipeline_mode<synchronous>, transform_indices = @transform_4, window_bounds = array<i64: 1, 128>}, {pipeline_mode = #tpu.pipeline_mode<synchronous>, transform_indices = @transform_5, window_bounds = array<i64: 128, 64>}, {pipeline_mode = #tpu.pipeline_mode<synchronous>, transform_indices = @transform_6, window_bounds = array<i64: 1, 64>}, {pipeline_mode = #tpu.pipeline_mode<synchronous>, transform_indices = @transform_7, window_bounds = array<i64: 64, 2>}, {pipeline_mode = #tpu.pipeline_mode<synchronous>, transform_indices = @transform_8, window_bounds = array<i64: 1, 2>}, {transform_indices = @transform_9, window_bounds = array<i64: 8, 2>}]} {
    %c0 = arith.constant 0 : index
    %c0_0 = arith.constant 0 : index
    %0 = vector.load %arg3[%c0, %c0_0] : memref<1x128xf32, #tpu.memory_space<vmem>>, vector<1x128xf32>
    %c0_1 = arith.constant 0 : index
    %c0_2 = arith.constant 0 : index
    %1 = vector.load %arg5[%c0_1, %c0_2] : memref<1x128xf32, #tpu.memory_space<vmem>>, vector<1x128xf32>
    %c0_3 = arith.constant 0 : index
    %c0_4 = arith.constant 0 : index
    %2 = vector.load %arg7[%c0_3, %c0_4] : memref<1x64xf32, #tpu.memory_space<vmem>>, vector<1x64xf32>
    %c0_5 = arith.constant 0 : index
    %c0_6 = arith.constant 0 : index
    %3 = vector.load %arg9[%c0_5, %c0_6] : memref<1x2xf32, #tpu.memory_space<vmem>>, vector<1x2xf32>
    %c0_7 = arith.constant 0 : index
    %c0_8 = arith.constant 0 : index
    %4 = vector.load %arg1[%c0_7, %c0_8] : memref<8x32xf32, #tpu.memory_space<vmem>>, vector<8x32xf32>
    %5 = arith.truncf %4 : vector<8x32xf32> to vector<8x32xbf16>
    %c0_9 = arith.constant 0 : index
    %c0_10 = arith.constant 0 : index
    %6 = vector.load %arg2[%c0_9, %c0_10] : memref<32x128xbf16, #tpu.memory_space<vmem>>, vector<32x128xbf16>
    %cst = arith.constant dense<0.000000e+00> : vector<8x128xf32>
    %7 = tpu.matmul %5, %6, %cst {dimension_numbers = #tpu.dot_dimension_numbers<[1], [0], [0], [1], [0, 0, 1, 1], [], []>} : vector<8x32xbf16>, vector<32x128xbf16>, vector<8x128xf32> -> vector<8x128xf32>
    %8 = vector.broadcast %0 : vector<1x128xf32> to vector<8x128xf32>
    %9 = arith.addf %7, %8 : vector<8x128xf32>
    %10 = arith.truncf %9 : vector<8x128xf32> to vector<8x128xbf16>
    %cst_11 = arith.constant 5.000000e-01 : bf16
    %11 = vector.broadcast %cst_11 : bf16 to vector<8x128xbf16>
    %12 = arith.mulf %11, %10 : vector<8x128xbf16>
    %cst_12 = arith.constant 5.000000e-01 : bf16
    %13 = vector.broadcast %cst_12 : bf16 to vector<8x128xbf16>
    %14 = arith.mulf %13, %10 : vector<8x128xbf16>
    %15 = math.tanh %14 : vector<8x128xbf16>
    %cst_13 = arith.constant 1.000000e+00 : bf16
    %16 = vector.broadcast %cst_13 : bf16 to vector<8x128xbf16>
    %17 = arith.addf %15, %16 : vector<8x128xbf16>
    %18 = arith.mulf %12, %17 : vector<8x128xbf16>
    %c0_14 = arith.constant 0 : index
    %c0_15 = arith.constant 0 : index
    %19 = vector.load %arg4[%c0_14, %c0_15] : memref<128x128xbf16, #tpu.memory_space<vmem>>, vector<128x128xbf16>
    %cst_16 = arith.constant dense<0.000000e+00> : vector<8x128xf32>
    %20 = tpu.matmul %18, %19, %cst_16 {dimension_numbers = #tpu.dot_dimension_numbers<[1], [0], [0], [1], [0, 0, 1, 1], [], []>} : vector<8x128xbf16>, vector<128x128xbf16>, vector<8x128xf32> -> vector<8x128xf32>
    %21 = vector.broadcast %1 : vector<1x128xf32> to vector<8x128xf32>
    %22 = arith.addf %20, %21 : vector<8x128xf32>
    %23 = arith.truncf %22 : vector<8x128xf32> to vector<8x128xbf16>
    %cst_17 = arith.constant 5.000000e-01 : bf16
    %24 = vector.broadcast %cst_17 : bf16 to vector<8x128xbf16>
    %25 = arith.mulf %24, %23 : vector<8x128xbf16>
    %cst_18 = arith.constant 5.000000e-01 : bf16
    %26 = vector.broadcast %cst_18 : bf16 to vector<8x128xbf16>
    %27 = arith.mulf %26, %23 : vector<8x128xbf16>
    %28 = math.tanh %27 : vector<8x128xbf16>
    %cst_19 = arith.constant 1.000000e+00 : bf16
    %29 = vector.broadcast %cst_19 : bf16 to vector<8x128xbf16>
    %30 = arith.addf %28, %29 : vector<8x128xbf16>
    %31 = arith.mulf %25, %30 : vector<8x128xbf16>
    %c0_20 = arith.constant 0 : index
    %c0_21 = arith.constant 0 : index
    %32 = vector.load %arg6[%c0_20, %c0_21] : memref<128x64xbf16, #tpu.memory_space<vmem>>, vector<128x64xbf16>
    %cst_22 = arith.constant dense<0.000000e+00> : vector<8x64xf32>
    %33 = tpu.matmul %31, %32, %cst_22 {dimension_numbers = #tpu.dot_dimension_numbers<[1], [0], [0], [1], [0, 0, 1, 1], [], []>} : vector<8x128xbf16>, vector<128x64xbf16>, vector<8x64xf32> -> vector<8x64xf32>
    %34 = vector.broadcast %2 : vector<1x64xf32> to vector<8x64xf32>
    %35 = arith.addf %33, %34 : vector<8x64xf32>
    %36 = arith.truncf %35 : vector<8x64xf32> to vector<8x64xbf16>
    %cst_23 = arith.constant 5.000000e-01 : bf16
    %37 = vector.broadcast %cst_23 : bf16 to vector<8x64xbf16>
    %38 = arith.mulf %37, %36 : vector<8x64xbf16>
    %cst_24 = arith.constant 5.000000e-01 : bf16
    %39 = vector.broadcast %cst_24 : bf16 to vector<8x64xbf16>
    %40 = arith.mulf %39, %36 : vector<8x64xbf16>
    %41 = math.tanh %40 : vector<8x64xbf16>
    %cst_25 = arith.constant 1.000000e+00 : bf16
    %42 = vector.broadcast %cst_25 : bf16 to vector<8x64xbf16>
    %43 = arith.addf %41, %42 : vector<8x64xbf16>
    %44 = arith.mulf %38, %43 : vector<8x64xbf16>
    %c0_26 = arith.constant 0 : index
    %c0_27 = arith.constant 0 : index
    %45 = vector.load %arg8[%c0_26, %c0_27] : memref<64x2xbf16, #tpu.memory_space<vmem>>, vector<64x2xbf16>
    %cst_28 = arith.constant dense<0.000000e+00> : vector<8x2xf32>
    %46 = tpu.matmul %44, %45, %cst_28 {dimension_numbers = #tpu.dot_dimension_numbers<[1], [0], [0], [1], [0, 0, 1, 1], [], []>} : vector<8x64xbf16>, vector<64x2xbf16>, vector<8x2xf32> -> vector<8x2xf32>
    %47 = vector.broadcast %3 : vector<1x2xf32> to vector<8x2xf32>
    %48 = arith.addf %46, %47 : vector<8x2xf32>
    %c0_29 = arith.constant 0 : index
    %c0_30 = arith.constant 0 : index
    %49 = vector.load %arg10[%c0_29, %c0_30] : memref<8x2xf32, #tpu.memory_space<vmem>>, vector<8x2xf32>
    tpu.vector_store %arg10[%c0_29, %c0_30], %48 {strides = array<i32>} : memref<8x2xf32, #tpu.memory_space<vmem>>, vector<8x2xf32>,
    return
  }
  func.func @transform_0(%arg0: i32) -> (i32, i32) {
    %c0_i32 = arith.constant 0 : i32
    %c0_i32_0 = arith.constant 0 : i32
    return %arg0, %c0_i32 : i32, i32
  }
  func.func @transform_1(%arg0: i32) -> (i32, i32) {
    %c0_i32 = arith.constant 0 : i32
    %c0_i32_0 = arith.constant 0 : i32
    %c0_i32_1 = arith.constant 0 : i32
    return %c0_i32, %c0_i32_0 : i32, i32
  }
  func.func @transform_2(%arg0: i32) -> (i32, i32) {
    %c0_i32 = arith.constant 0 : i32
    %c0_i32_0 = arith.constant 0 : i32
    %c0_i32_1 = arith.constant 0 : i32
    return %c0_i32, %c0_i32_0 : i32, i32
  }
  func.func @transform_3(%arg0: i32) -> (i32, i32) {
    %c0_i32 = arith.constant 0 : i32
    %c0_i32_0 = arith.constant 0 : i32
    %c0_i32_1 = arith.constant 0 : i32
    return %c0_i32, %c0_i32_0 : i32, i32
  }
  func.func @transform_4(%arg0: i32) -> (i32, i32) {
    %c0_i32 = arith.constant 0 : i32
    %c0_i32_0 = arith.constant 0 : i32
    %c0_i32_1 = arith.constant 0 : i32
    return %c0_i32, %c0_i32_0 : i32, i32
  }
  func.func @transform_5(%arg0: i32) -> (i32, i32) {
    %c0_i32 = arith.constant 0 : i32
    %c0_i32_0 = arith.constant 0 : i32
    %c0_i32_1 = arith.constant 0 : i32
    return %c0_i32, %c0_i32_0 : i32, i32
  }
  func.func @transform_6(%arg0: i32) -> (i32, i32) {
    %c0_i32 = arith.constant 0 : i32
    %c0_i32_0 = arith.constant 0 : i32
    %c0_i32_1 = arith.constant 0 : i32
    return %c0_i32, %c0_i32_0 : i32, i32
  }
  func.func @transform_7(%arg0: i32) -> (i32, i32) {
    %c0_i32 = arith.constant 0 : i32
    %c0_i32_0 = arith.constant 0 : i32
    %c0_i32_1 = arith.constant 0 : i32
    return %c0_i32, %c0_i32_0 : i32, i32
  }
  func.func @transform_8(%arg0: i32) -> (i32, i32) {
    %c0_i32 = arith.constant 0 : i32
    %c0_i32_0 = arith.constant 0 : i32
    %c0_i32_1 = arith.constant 0 : i32
    return %c0_i32, %c0_i32_0 : i32, i32
  }
  func.func @transform_9(%arg0: i32) -> (i32, i32) {
    %c0_i32 = arith.constant 0 : i32
    %c0_i32_0 = arith.constant 0 : i32
    return %arg0, %c0_i32 : i32, i32
  }
}

</mosaic_0001>

<llo_original>
// kernel: discritor_code_forward.1
$region0: #{discritor_code_forward.1}
  #allocation0 [shape = 'u32[]', space=smem, size = 0x4, offset = 0x4, fixed_abs, tag = 'smem constant byte address 0x4 - core index']
  #allocation1 [shape = 'u32[72,128]{1,0:T(1,128)}', space=vmem, size = 0x9000, scoped, tag = 'internal scratch']
  %s0 = inlined_call_operand.vmem [shape: f32[16,32], index: 0, kind: input, shape index: {}]
  %s1 = inlined_call_operand.vmem [shape: bf16[32,128], index: 1, kind: input, shape index: {}]
  %s2 = inlined_call_operand.vmem [shape: f32[1,128], index: 2, kind: input, shape index: {}]
  %s3 = inlined_call_operand.vmem [shape: bf16[128,128], index: 3, kind: input, shape index: {}]
  %s4 = inlined_call_operand.vmem [shape: f32[1,128], index: 4, kind: input, shape index: {}]
  %s5 = inlined_call_operand.vmem [shape: bf16[128,64], index: 5, kind: input, shape index: {}]
  %s6 = inlined_call_operand.vmem [shape: f32[1,64], index: 6, kind: input, shape index: {}]
  %s7 = inlined_call_operand.vmem [shape: bf16[64,2], index: 7, kind: input, shape index: {}]
  %s8 = inlined_call_operand.vmem [shape: f32[1,2], index: 8, kind: input, shape index: {}]
  %s9 = inlined_call_operand.vmem [shape: f32[16,2], index: 9, kind: output, shape index: {}]
  %s10 = sld [smem:[#allocation0]]
  $region69: #{discritor_code_forward.1} parent=0
    _
  %s12 = ssub.s32 1, %s10
  %s13 = scalar_select 0, %s12, %s10
  loop: start=0, step=1, limit=4
  $region2: #{discritor_code_forward.1} parent=0 // loop_pre_header
    _
  $region3: #{discritor_code_forward.1} parent=0 // loop_header
    %s15 = sphi 0, %s19
    %p16 = scmp.ge.s32.totalorder %s15, 4
    %s25 = sphi 0, %s27
    %s28 = sphi 0, %s25
    %s29 = sphi 0, %s28
    %s45 = sphi 0, %s29
    %s49 = sphi 0, %s49
    %s51 = sphi 0, %s49
    %s52 = sphi 0, %s51
    %s66 = sphi 0, %s52
    %s70 = sphi 0, %s70
    %s72 = sphi 0, %s70
    %s73 = sphi 0, %s72
    %s87 = sphi 0, %s73
    %s91 = sphi 0, %s91
    %s93 = sphi 0, %s91
    %s94 = sphi 0, %s93
    %s108 = sphi 0, %s94
    %s112 = sphi 0, %s112
    %s114 = sphi 0, %s112
    %s115 = sphi 0, %s114
    %s129 = sphi 0, %s115
    %s133 = sphi 0, %s133
    %s135 = sphi 0, %s133
    %s136 = sphi 0, %s135
    %s150 = sphi 0, %s136
    %s154 = sphi 0, %s154
    %s156 = sphi 0, %s154
    %s157 = sphi 0, %s156
    %s171 = sphi 0, %s157
    %s175 = sphi 0, %s175
    %s177 = sphi 0, %s175
    %s178 = sphi 0, %s177
    %s192 = sphi 0, %s178
    %s196 = sphi 0, %s196
    %s198 = sphi 0, %s196
    %s199 = sphi 0, %s198
    %s213 = sphi 0, %s199
    %s219 = sphi 0, %s221
    %s222 = sphi 0, %s219
    %s223 = sphi 0, %s222
    %s239 = sphi 0, %s223
  $region4: #{discritor_code_forward.1} parent=0 // loop_header_branch
    %18 = sbr.rel (%p16) target = $region8
  $region5: #{discritor_code_forward.1} parent=0 // loop_body
    %s20 = ssub.s32 %s15, 1
    %s21 = ssub.s32 %s15, 2
    %s22 = sadd.s32 %s15, 1
    %s23 = ssub.s32 %s15, %s22
    %p24 = scmp.eq.s32.totalorder %s23, 0
    %s26 = sadd.s32 %s25, 1
    %s27 = scalar_select %p24, %s25, %s26
    %p30 = pneg %p24
    %p31 = scmp.eq.s32.totalorder %s15, 1
    %p32 = por %p30, %p31
    %p33 = scmp.ne.s32.totalorder %s25, %s28
    %p34 = scmp.eq.s32.totalorder %s15, 0
    %p35 = por %p33, %p34
    %p36 = scmp.ne.s32.totalorder %s25, %s28
    %p37 = scmp.eq.s32.totalorder %s20, 1
    %p38 = por %p36, %p37
    %p39 = scmp.ne.s32.totalorder %s28, %s29
    %p40 = scmp.eq.s32.totalorder %s20, 0
    %p41 = por %p39, %p40
    %p42 = scmp.ne.s32.totalorder %s28, %s29
    %p43 = scmp.eq.s32.totalorder %s21, 1
    %p44 = por %p42, %p43
    %p46 = scmp.ne.s32.totalorder %s29, %s45
    %p47 = scmp.eq.s32.totalorder %s21, 0
    %p48 = por %p46, %p47
    %s50 = sadd.s32 %s49, 1
    %p53 = scmp.eq.s32.totalorder %s15, 1
    %p54 = scmp.ne.s32.totalorder %s49, %s51
    %p55 = scmp.eq.s32.totalorder %s15, 0
    %p56 = por %p54, %p55
    %p57 = scmp.ne.s32.totalorder %s49, %s51
    %p58 = scmp.eq.s32.totalorder %s20, 1
    %p59 = por %p57, %p58
    %p60 = scmp.ne.s32.totalorder %s51, %s52
    %p61 = scmp.eq.s32.totalorder %s20, 0
    %p62 = por %p60, %p61
    %p63 = scmp.ne.s32.totalorder %s51, %s52
    %p64 = scmp.eq.s32.totalorder %s21, 1
    %p65 = por %p63, %p64
    %p67 = scmp.ne.s32.totalorder %s52, %s66
    %p68 = scmp.eq.s32.totalorder %s21, 0
    %p69 = por %p67, %p68
    %s71 = sadd.s32 %s70, 1
    %p74 = scmp.eq.s32.totalorder %s15, 1
    %p75 = scmp.ne.s32.totalorder %s70, %s72
    %p76 = scmp.eq.s32.totalorder %s15, 0
    %p77 = por %p75, %p76
    %p78 = scmp.ne.s32.totalorder %s70, %s72
    %p79 = scmp.eq.s32.totalorder %s20, 1
    %p80 = por %p78, %p79
    %p81 = scmp.ne.s32.totalorder %s72, %s73
    %p82 = scmp.eq.s32.totalorder %s20, 0
    %p83 = por %p81, %p82
    %p84 = scmp.ne.s32.totalorder %s72, %s73
    %p85 = scmp.eq.s32.totalorder %s21, 1
    %p86 = por %p84, %p85
    %p88 = scmp.ne.s32.totalorder %s73, %s87
    %p89 = scmp.eq.s32.totalorder %s21, 0
    %p90 = por %p88, %p89
    %s92 = sadd.s32 %s91, 1
    %p95 = scmp.eq.s32.totalorder %s15, 1
    %p96 = scmp.ne.s32.totalorder %s91, %s93
    %p97 = scmp.eq.s32.totalorder %s15, 0
    %p98 = por %p96, %p97
    %p99 = scmp.ne.s32.totalorder %s91, %s93
    %p100 = scmp.eq.s32.totalorder %s20, 1
    %p101 = por %p99, %p100
    %p102 = scmp.ne.s32.totalorder %s93, %s94
    %p103 = scmp.eq.s32.totalorder %s20, 0
    %p104 = por %p102, %p103
    %p105 = scmp.ne.s32.totalorder %s93, %s94
    %p106 = scmp.eq.s32.totalorder %s21, 1
    %p107 = por %p105, %p106
    %p109 = scmp.ne.s32.totalorder %s94, %s108
    %p110 = scmp.eq.s32.totalorder %s21, 0
    %p111 = por %p109, %p110
    %s113 = sadd.s32 %s112, 1
    %p116 = scmp.eq.s32.totalorder %s15, 1
    %p117 = scmp.ne.s32.totalorder %s112, %s114
    %p118 = scmp.eq.s32.totalorder %s15, 0
    %p119 = por %p117, %p118
    %p120 = scmp.ne.s32.totalorder %s112, %s114
    %p121 = scmp.eq.s32.totalorder %s20, 1
    %p122 = por %p120, %p121
    %p123 = scmp.ne.s32.totalorder %s114, %s115
    %p124 = scmp.eq.s32.totalorder %s20, 0
    %p125 = por %p123, %p124
    %p126 = scmp.ne.s32.totalorder %s114, %s115
    %p127 = scmp.eq.s32.totalorder %s21, 1
    %p128 = por %p126, %p127
    %p130 = scmp.ne.s32.totalorder %s115, %s129
    %p131 = scmp.eq.s32.totalorder %s21, 0
    %p132 = por %p130, %p131
    %s134 = sadd.s32 %s133, 1
    %p137 = scmp.eq.s32.totalorder %s15, 1
    %p138 = scmp.ne.s32.totalorder %s133, %s135
    %p139 = scmp.eq.s32.totalorder %s15, 0
    %p140 = por %p138, %p139
    %p141 = scmp.ne.s32.totalorder %s133, %s135
    %p142 = scmp.eq.s32.totalorder %s20, 1
    %p143 = por %p141, %p142
    %p144 = scmp.ne.s32.totalorder %s135, %s136
    %p145 = scmp.eq.s32.totalorder %s20, 0
    %p146 = por %p144, %p145
    %p147 = scmp.ne.s32.totalorder %s135, %s136
    %p148 = scmp.eq.s32.totalorder %s21, 1
    %p149 = por %p147, %p148
    %p151 = scmp.ne.s32.totalorder %s136, %s150
    %p152 = scmp.eq.s32.totalorder %s21, 0
    %p153 = por %p151, %p152
    %s155 = sadd.s32 %s154, 1
    %p158 = scmp.eq.s32.totalorder %s15, 1
    %p159 = scmp.ne.s32.totalorder %s154, %s156
    %p160 = scmp.eq.s32.totalorder %s15, 0
    %p161 = por %p159, %p160
    %p162 = scmp.ne.s32.totalorder %s154, %s156
    %p163 = scmp.eq.s32.totalorder %s20, 1
    %p164 = por %p162, %p163
    %p165 = scmp.ne.s32.totalorder %s156, %s157
    %p166 = scmp.eq.s32.totalorder %s20, 0
    %p167 = por %p165, %p166
    %p168 = scmp.ne.s32.totalorder %s156, %s157
    %p169 = scmp.eq.s32.totalorder %s21, 1
    %p170 = por %p168, %p169
    %p172 = scmp.ne.s32.totalorder %s157, %s171
    %p173 = scmp.eq.s32.totalorder %s21, 0
    %p174 = por %p172, %p173
    %s176 = sadd.s32 %s175, 1
    %p179 = scmp.eq.s32.totalorder %s15, 1
    %p180 = scmp.ne.s32.totalorder %s175, %s177
    %p181 = scmp.eq.s32.totalorder %s15, 0
    %p182 = por %p180, %p181
    %p183 = scmp.ne.s32.totalorder %s175, %s177
    %p184 = scmp.eq.s32.totalorder %s20, 1
    %p185 = por %p183, %p184
    %p186 = scmp.ne.s32.totalorder %s177, %s178
    %p187 = scmp.eq.s32.totalorder %s20, 0
    %p188 = por %p186, %p187
    %p189 = scmp.ne.s32.totalorder %s177, %s178
    %p190 = scmp.eq.s32.totalorder %s21, 1
    %p191 = por %p189, %p190
    %p193 = scmp.ne.s32.totalorder %s178, %s192
    %p194 = scmp.eq.s32.totalorder %s21, 0
    %p195 = por %p193, %p194
    %s197 = sadd.s32 %s196, 1
    %p200 = scmp.eq.s32.totalorder %s15, 1
    %p201 = scmp.ne.s32.totalorder %s196, %s198
    %p202 = scmp.eq.s32.totalorder %s15, 0
    %p203 = por %p201, %p202
    %p204 = scmp.ne.s32.totalorder %s196, %s198
    %p205 = scmp.eq.s32.totalorder %s20, 1
    %p206 = por %p204, %p205
    %p207 = scmp.ne.s32.totalorder %s198, %s199
    %p208 = scmp.eq.s32.totalorder %s20, 0
    %p209 = por %p207, %p208
    %p210 = scmp.ne.s32.totalorder %s198, %s199
    %p211 = scmp.eq.s32.totalorder %s21, 1
    %p212 = por %p210, %p211
    %p214 = scmp.ne.s32.totalorder %s199, %s213
    %p215 = scmp.eq.s32.totalorder %s21, 0
    %p216 = por %p214, %p215
    %s217 = ssub.s32 %s15, %s22
    %p218 = scmp.eq.s32.totalorder %s217, 0
    %s220 = sadd.s32 %s219, 1
    %s221 = scalar_select %p218, %s219, %s220
    %p224 = pneg %p218
    %p225 = scmp.eq.s32.totalorder %s15, 1
    %p226 = por %p224, %p225
    %p227 = scmp.ne.s32.totalorder %s219, %s222
    %p228 = scmp.eq.s32.totalorder %s15, 0
    %p229 = por %p227, %p228
    %p230 = scmp.ne.s32.totalorder %s219, %s222
    %p231 = scmp.eq.s32.totalorder %s20, 1
    %p232 = por %p230, %p231
    %p233 = scmp.ne.s32.totalorder %s222, %s223
    %p234 = scmp.eq.s32.totalorder %s20, 0
    %p235 = por %p233, %p234
    %p236 = scmp.ne.s32.totalorder %s222, %s223
    %p237 = scmp.eq.s32.totalorder %s21, 1
    %p238 = por %p236, %p237
    %p240 = scmp.ne.s32.totalorder %s223, %s239
    %p241 = scmp.eq.s32.totalorder %s21, 0
    %p242 = por %p240, %p241
    %p243 = scmp.le.s32.totalorder 1, %s15
    %p244 = scmp.lt.s32.totalorder %s15, 3
    %p245 = pnand %p243, %p244
    %p246 = pneg %p245
    // Predicated region
    $region9: #{discritor_code_forward.1} parent=5 // pred_check
      _
    $region10: #{discritor_code_forward.1} parent=5 // pred_check_branch
      %248 = sbr.rel (%p245) target = $region12
    $region11: #{discritor_code_forward.1} parent=5 // pred_region
      %s249 = ssub.s32 %s15, 1
      // Predicated region
      $region13: #{discritor_code_forward.1} parent=11 // pred_check
        %p250 = pneg %p62
      $region14: #{discritor_code_forward.1} parent=11 // pred_check_branch
        %252 = sbr.rel (%p250) target = $region16
      $region15: #{discritor_code_forward.1} parent=11 // pred_region
        _
      $region16: #{discritor_code_forward.1} parent=11 // pred_fallthru
        _
      // Predicated region
      $region17: #{discritor_code_forward.1} parent=11 // pred_check
        %p253 = pneg %p83
      $region18: #{discritor_code_forward.1} parent=11 // pred_check_branch
        %255 = sbr.rel (%p253) target = $region20
      $region19: #{discritor_code_forward.1} parent=11 // pred_region
        _
      $region20: #{discritor_code_forward.1} parent=11 // pred_fallthru
        _
      // Predicated region
      $region21: #{discritor_code_forward.1} parent=11 // pred_check
        %p256 = pneg %p104
      $region22: #{discritor_code_forward.1} parent=11 // pred_check_branch
        %258 = sbr.rel (%p256) target = $region24
      $region23: #{discritor_code_forward.1} parent=11 // pred_region
        _
      $region24: #{discritor_code_forward.1} parent=11 // pred_fallthru
        _
      // Predicated region
      $region25: #{discritor_code_forward.1} parent=11 // pred_check
        %p259 = pneg %p125
      $region26: #{discritor_code_forward.1} parent=11 // pred_check_branch
        %261 = sbr.rel (%p259) target = $region28
      $region27: #{discritor_code_forward.1} parent=11 // pred_region
        _
      $region28: #{discritor_code_forward.1} parent=11 // pred_fallthru
        _
      // Predicated region
      $region29: #{discritor_code_forward.1} parent=11 // pred_check
        %p262 = pneg %p146
      $region30: #{discritor_code_forward.1} parent=11 // pred_check_branch
        %264 = sbr.rel (%p262) target = $region32
      $region31: #{discritor_code_forward.1} parent=11 // pred_region
        _
      $region32: #{discritor_code_forward.1} parent=11 // pred_fallthru
        _
      // Predicated region
      $region33: #{discritor_code_forward.1} parent=11 // pred_check
        %p265 = pneg %p167
      $region34: #{discritor_code_forward.1} parent=11 // pred_check_branch
        %267 = sbr.rel (%p265) target = $region36
      $region35: #{discritor_code_forward.1} parent=11 // pred_region
        _
      $region36: #{discritor_code_forward.1} parent=11 // pred_fallthru
        _
      // Predicated region
      $region37: #{discritor_code_forward.1} parent=11 // pred_check
        %p268 = pneg %p188
      $region38: #{discritor_code_forward.1} parent=11 // pred_check_branch
        %270 = sbr.rel (%p268) target = $region40
      $region39: #{discritor_code_forward.1} parent=11 // pred_region
        _
      $region40: #{discritor_code_forward.1} parent=11 // pred_fallthru
        _
      // Predicated region
      $region41: #{discritor_code_forward.1} parent=11 // pred_check
        %p271 = pneg %p209
      $region42: #{discritor_code_forward.1} parent=11 // pred_check_branch
        %273 = sbr.rel (%p271) target = $region44
      $region43: #{discritor_code_forward.1} parent=11 // pred_region
        _
      $region44: #{discritor_code_forward.1} parent=11 // pred_fallthru
        _
    $region12: #{discritor_code_forward.1} parent=5 // pred_fallthru
      _
    %p274 = scmp.lt.s32.totalorder %s15, 2
    // Predicated region
    $region45: #{discritor_code_forward.1} parent=5 // pred_check
      %p275 = pneg %p274
    $region46: #{discritor_code_forward.1} parent=5 // pred_check_branch
      %277 = sbr.rel (%p275) target = $region48
    $region47: #{discritor_code_forward.1} parent=5 // pred_region
      // Predicated region
      $region49: #{discritor_code_forward.1} parent=47 // pred_check
        %p278 = pneg %p35
      $region50: #{discritor_code_forward.1} parent=47 // pred_check_branch
        %280 = sbr.rel (%p278) target = $region52
      $region51: #{discritor_code_forward.1} parent=47 // pred_region
        %p281 = scmp.lt.s32.totalorder %s15, 1
        %s282 = scalar_select %p281, %s15, 1
        %s283 = smul.addr %s282, 8
        %s284 = scalar_lea.vmem %s0, %s283
      $region52: #{discritor_code_forward.1} parent=47 // pred_fallthru
        _
    $region48: #{discritor_code_forward.1} parent=5 // pred_fallthru
      _
    %p285 = scmp.le.s32.totalorder 1, %s15
    %p286 = scmp.lt.s32.totalorder %s15, 3
    %p287 = pnand %p285, %p286
    %p288 = pneg %p287
    // Predicated region
    $region53: #{discritor_code_forward.1} parent=5 // pred_check
      _
    $region54: #{discritor_code_forward.1} parent=5 // pred_check_branch
      %290 = sbr.rel (%p287) target = $region56
    $region55: #{discritor_code_forward.1} parent=5 // pred_region
      %s291 = ssub.s32 %s15, 1
      %p292 = scmp.lt.s32.totalorder %s20, 1
      %s293 = scalar_select %p292, %s20, 1
      %s294 = smul.addr %s293, 8
      %s295 = scalar_lea.vmem %s0, %s294
      %p296 = pneg %p41
      %p297 = pneg %p38
      %p298 = pneg %p62
      %p299 = pneg %p59
      %p300 = pneg %p83
      %p301 = pneg %p80
      %p302 = pneg %p104
      %p303 = pneg %p101
      %p304 = pneg %p125
      %p305 = pneg %p122
      %p306 = pneg %p146
      %p307 = pneg %p143
      %p308 = pneg %p167
      %p309 = pneg %p164
      %p310 = pneg %p188
      %p311 = pneg %p185
      %p312 = pneg %p209
      %p313 = pneg %p206
      %p314 = pneg %p235
      %p315 = pneg %p232
      %p316 = scmp.lt.s32.totalorder %s20, 1
      %s317 = scalar_select %p316, %s20, 1
      %s318 = smul.addr %s317, 8
      %s319 = scalar_lea.vmem %s9, %s318
      %p320 = scmp.lt.s32.totalorder %s20, 1
      %s321 = scalar_select %p320, %s20, 1
      %s322 = smul.addr %s321, 8
      %s323 = scalar_lea.vmem %s0, %s322
      %p324 = scmp.lt.s32.totalorder %s20, 1
      %s325 = scalar_select %p324, %s20, 1
      %s326 = smul.addr %s325, 8
      %s327 = scalar_lea.vmem %s9, %s326
      %v329 = vld [vmem:[%s2] sm:$0x1]
      %v330 = vld [vmem:[%s4] sm:$0x1]
      %v331 = vld [vmem:[%s6] sm:$0x1]
      %v332 = vld [vmem:[%s8] sm:$0x1]
      %v333 = vld [vmem:[%s323] sm:$0xff]
      %v334 = vpack.c.bf16 %v333, %v333
      %v335 = vld [vmem:[%s1] sm:$0xf]
      %v336 = vld [vmem:[%s1 + $0x4] sm:$0xf]
      %v337 = vld [vmem:[%s1 + $0x8] sm:$0xf]
      %v338 = vld [vmem:[%s1 + $0xc] sm:$0xf]
      %v340 = vperm.slane %v329, 0
      %v346 = vunpack.c.l.b16 %v335
      %v347 = vunpack.c.l.b16 %v336
      %v348 = vunpack.c.l.b16 %v337
      %v349 = vunpack.c.l.b16 %v338
      %v350 = vpack.c.b16 %v347, %v346
      %v351 = vpack.c.b16 %v349, %v348
      %vm354 = vcmask 261120
      %v356 = vsel %vm354, %v334, 0
      %358 = vmatpush.bf16.msra.mxu0 0
      %359 = vmatpush.bf16.msra.mxu0 0
      %360 = vmatpush.bf16.msra.mxu0 0
      %361 = vmatpush.bf16.msra.mxu0 0
      %362 = vmatpush.bf16.msra.mxu0 0
      %363 = vmatpush.bf16.msra.mxu0 0
      %364 = vmatpush.bf16.msra.mxu0 %v351
      %365 = vmatpush.bf16.msra.mxu0 %v350
      %366 = vmatmul.bf16.gmra.mxu0 %v356
      %v367 = vpop.f32.mrf.mxu0
      %v368 = vadd.f32 %v340, %v367
      %v369 = vpop.f32.mrf.mxu0
      %370 = vdwg.mxu0
      %v371 = vpack.c.bf16 %v368, %v368
      %v372 = vunpack.c.l.bf16 %v371
      %v373 = vmul.f32 %v372, 0.5
      %v374 = vpack.c.bf16 %v373, %v373
      %v375 = vunpack.c.l.bf16 %v374
      %v376 = vtanh.pop %v375
      %v377 = vpack.c.bf16 %v376, %v376
      %v378 = vunpack.c.l.bf16 %v377
      %v379 = vadd.f32 %v378, 1.0
      %v380 = vpack.c.bf16 %v379, %v379
      %v381 = vunpack.c.l.bf16 %v380
      %v382 = vmul.f32 %v375, %v381
      %v383 = vpack.c.bf16 %v382, %v382
      %v384 = vld [vmem:[%s3] sm:$0xf]
      %v385 = vld [vmem:[%s3 + $0x4] sm:$0xf]
      %v386 = vld [vmem:[%s3 + $0x8] sm:$0xf]
      %v387 = vld [vmem:[%s3 + $0xc] sm:$0xf]
      %v388 = vld [vmem:[%s3 + $0x10] sm:$0xf]
      %v389 = vld [vmem:[%s3 + $0x14] sm:$0xf]
      %v390 = vld [vmem:[%s3 + $0x18] sm:$0xf]
      %v391 = vld [vmem:[%s3 + $0x1c] sm:$0xf]
      %v392 = vld [vmem:[%s3 + $0x20] sm:$0xf]
      %v393 = vld [vmem:[%s3 + $0x24] sm:$0xf]
      %v394 = vld [vmem:[%s3 + $0x28] sm:$0xf]
      %v395 = vld [vmem:[%s3 + $0x2c] sm:$0xf]
      %v396 = vld [vmem:[%s3 + $0x30] sm:$0xf]
      %v397 = vld [vmem:[%s3 + $0x34] sm:$0xf]
      %v398 = vld [vmem:[%s3 + $0x38] sm:$0xf]
      %v399 = vld [vmem:[%s3 + $0x3c] sm:$0xf]
      %v401 = vperm.slane %v330, 0
      %v419 = vunpack.c.l.b16 %v384
      %v420 = vunpack.c.l.b16 %v385
      %v421 = vunpack.c.l.b16 %v386
      %v422 = vunpack.c.l.b16 %v387
      %v423 = vunpack.c.l.b16 %v388
      %v424 = vunpack.c.l.b16 %v389
      %v425 = vunpack.c.l.b16 %v390
      %v426 = vunpack.c.l.b16 %v391
      %v427 = vunpack.c.l.b16 %v392
      %v428 = vunpack.c.l.b16 %v393
      %v429 = vunpack.c.l.b16 %v394
      %v430 = vunpack.c.l.b16 %v395
      %v431 = vunpack.c.l.b16 %v396
      %v432 = vunpack.c.l.b16 %v397
      %v433 = vunpack.c.l.b16 %v398
      %v434 = vunpack.c.l.b16 %v399
      %v435 = vpack.c.b16 %v420, %v419
      %v436 = vpack.c.b16 %v422, %v421
      %v437 = vpack.c.b16 %v424, %v423
      %v438 = vpack.c.b16 %v426, %v425
      %v439 = vpack.c.b16 %v428, %v427
      %v440 = vpack.c.b16 %v430, %v429
      %v441 = vpack.c.b16 %v432, %v431
      %v442 = vpack.c.b16 %v434, %v433
      %451 = vmatpush.bf16.msra.mxu0 %v442
      %452 = vmatpush.bf16.msra.mxu0 %v441
      %453 = vmatpush.bf16.msra.mxu0 %v440
      %454 = vmatpush.bf16.msra.mxu0 %v439
      %455 = vmatpush.bf16.msra.mxu0 %v438
      %456 = vmatpush.bf16.msra.mxu0 %v437
      %457 = vmatpush.bf16.msra.mxu0 %v436
      %458 = vmatpush.bf16.msra.mxu0 %v435
      %459 = vmatmul.bf16.gmra.mxu0 %v383
      %v460 = vpop.f32.mrf.mxu0
      %v461 = vadd.f32 %v401, %v460
      %v462 = vpop.f32.mrf.mxu0
      %463 = vdwg.mxu0
      %v464 = vpack.c.bf16 %v461, %v461
      %v465 = vunpack.c.l.bf16 %v464
      %v466 = vmul.f32 %v465, 0.5
      %v467 = vpack.c.bf16 %v466, %v466
      %v468 = vunpack.c.l.bf16 %v467
      %v469 = vtanh.pop %v468
      %v470 = vpack.c.bf16 %v469, %v469
      %v471 = vunpack.c.l.bf16 %v470
      %v472 = vadd.f32 %v471, 1.0
      %v473 = vpack.c.bf16 %v472, %v472
      %v474 = vunpack.c.l.bf16 %v473
      %v475 = vmul.f32 %v468, %v474
      %v476 = vpack.c.bf16 %v475, %v475
      %v477 = vld [vmem:[%s5] sm:$0xf]
      %v478 = vld [vmem:[%s5 + $0x4] sm:$0xf]
      %v479 = vld [vmem:[%s5 + $0x8] sm:$0xf]
      %v480 = vld [vmem:[%s5 + $0xc] sm:$0xf]
      %v481 = vld [vmem:[%s5 + $0x10] sm:$0xf]
      %v482 = vld [vmem:[%s5 + $0x14] sm:$0xf]
      %v483 = vld [vmem:[%s5 + $0x18] sm:$0xf]
      %v484 = vld [vmem:[%s5 + $0x1c] sm:$0xf]
      %v485 = vld [vmem:[%s5 + $0x20] sm:$0xf]
      %v486 = vld [vmem:[%s5 + $0x24] sm:$0xf]
      %v487 = vld [vmem:[%s5 + $0x28] sm:$0xf]
      %v488 = vld [vmem:[%s5 + $0x2c] sm:$0xf]
      %v489 = vld [vmem:[%s5 + $0x30] sm:$0xf]
      %v490 = vld [vmem:[%s5 + $0x34] sm:$0xf]
      %v491 = vld [vmem:[%s5 + $0x38] sm:$0xf]
      %v492 = vld [vmem:[%s5 + $0x3c] sm:$0xf]
      %v494 = vperm.slane %v331, 0
      %v512 = vunpack.c.l.b16 %v477
      %v513 = vunpack.c.l.b16 %v478
      %v514 = vunpack.c.l.b16 %v479
      %v515 = vunpack.c.l.b16 %v480
      %v516 = vunpack.c.l.b16 %v481
      %v517 = vunpack.c.l.b16 %v482
      %v518 = vunpack.c.l.b16 %v483
      %v519 = vunpack.c.l.b16 %v484
      %v520 = vunpack.c.l.b16 %v485
      %v521 = vunpack.c.l.b16 %v486
      %v522 = vunpack.c.l.b16 %v487
      %v523 = vunpack.c.l.b16 %v488
      %v524 = vunpack.c.l.b16 %v489
      %v525 = vunpack.c.l.b16 %v490
      %v526 = vunpack.c.l.b16 %v491
      %v527 = vunpack.c.l.b16 %v492
      %v528 = vpack.c.b16 %v513, %v512
      %v529 = vpack.c.b16 %v515, %v514
      %v530 = vpack.c.b16 %v517, %v516
      %v531 = vpack.c.b16 %v519, %v518
      %v532 = vpack.c.b16 %v521, %v520
      %v533 = vpack.c.b16 %v523, %v522
      %v534 = vpack.c.b16 %v525, %v524
      %v535 = vpack.c.b16 %v527, %v526
      %544 = vmatpush.bf16.msra.mxu0 %v535
      %545 = vmatpush.bf16.msra.mxu0 %v534
      %546 = vmatpush.bf16.msra.mxu0 %v533
      %547 = vmatpush.bf16.msra.mxu0 %v532
      %548 = vmatpush.bf16.msra.mxu0 %v531
      %549 = vmatpush.bf16.msra.mxu0 %v530
      %550 = vmatpush.bf16.msra.mxu0 %v529
      %551 = vmatpush.bf16.msra.mxu0 %v528
      %552 = vmatmul.bf16.gmra.mxu0 %v476
      %v553 = vpop.f32.mrf.mxu0
      %v554 = vadd.f32 %v494, %v553
      %v555 = vpop.f32.mrf.mxu0
      %556 = vdwg.mxu0
      %v557 = vpack.c.bf16 %v554, %v554
      %v558 = vunpack.c.l.bf16 %v557
      %v559 = vmul.f32 %v558, 0.5
      %v560 = vpack.c.bf16 %v559, %v559
      %v561 = vunpack.c.l.bf16 %v560
      %v562 = vtanh.pop %v561
      %v563 = vpack.c.bf16 %v562, %v562
      %v564 = vunpack.c.l.bf16 %v563
      %v565 = vadd.f32 %v564, 1.0
      %v566 = vpack.c.bf16 %v565, %v565
      %v567 = vunpack.c.l.bf16 %v566
      %v568 = vmul.f32 %v561, %v567
      %v569 = vpack.c.bf16 %v568, %v568
      %v570 = vld [vmem:[%s7] sm:$0xf]
      %v571 = vld [vmem:[%s7 + $0x4] sm:$0xf]
      %v572 = vld [vmem:[%s7 + $0x8] sm:$0xf]
      %v573 = vld [vmem:[%s7 + $0xc] sm:$0xf]
      %v574 = vld [vmem:[%s7 + $0x10] sm:$0xf]
      %v575 = vld [vmem:[%s7 + $0x14] sm:$0xf]
      %v576 = vld [vmem:[%s7 + $0x18] sm:$0xf]
      %v577 = vld [vmem:[%s7 + $0x1c] sm:$0xf]
      %v579 = vperm.slane %v332, 0
      %v589 = vunpack.c.l.b16 %v570
      %v590 = vunpack.c.l.b16 %v571
      %v591 = vunpack.c.l.b16 %v572
      %v592 = vunpack.c.l.b16 %v573
      %v593 = vunpack.c.l.b16 %v574
      %v594 = vunpack.c.l.b16 %v575
      %v595 = vunpack.c.l.b16 %v576
      %v596 = vunpack.c.l.b16 %v577
      %v597 = vpack.c.b16 %v590, %v589
      %v598 = vpack.c.b16 %v592, %v591
      %v599 = vpack.c.b16 %v594, %v593
      %v600 = vpack.c.b16 %v596, %v595
      %vm605 = vcmask 523264
      %v607 = vsel %vm605, %v569, 0
      %609 = vmatpush.bf16.msra.mxu0 0
      %610 = vmatpush.bf16.msra.mxu0 0
      %611 = vmatpush.bf16.msra.mxu0 0
      %612 = vmatpush.bf16.msra.mxu0 0
      %613 = vmatpush.bf16.msra.mxu0 %v600
      %614 = vmatpush.bf16.msra.mxu0 %v599
      %615 = vmatpush.bf16.msra.mxu0 %v598
      %616 = vmatpush.bf16.msra.mxu0 %v597
      %617 = vmatmul.bf16.gmra.mxu0 %v607
      %v618 = vpop.f32.mrf.mxu0
      %v619 = vadd.f32 %v579, %v618
      %v620 = vpop.f32.mrf.mxu0
      %621 = vdwg.mxu0
      %vm622 = vcmask 15360
      %623 = vst.msk [vmem:[%s327] sm:$0xff] %vm622, %v619
      %p624 = scmp.lt.s32.totalorder %s20, 1
      %s625 = scalar_select %p624, %s20, 1
      %s626 = smul.addr %s625, 8
      %s627 = scalar_lea.vmem %s9, %s626
      // Predicated region
      $region57: #{discritor_code_forward.1} parent=55 // pred_check
        %p628 = pneg %p232
      $region58: #{discritor_code_forward.1} parent=55 // pred_check_branch
        %630 = sbr.rel (%p628) target = $region60
      $region59: #{discritor_code_forward.1} parent=55 // pred_region
        _
      $region60: #{discritor_code_forward.1} parent=55 // pred_fallthru
        _
    $region56: #{discritor_code_forward.1} parent=5 // pred_fallthru
      _
    %p631 = scmp.le.s32.totalorder 2, %s15
    // Predicated region
    $region61: #{discritor_code_forward.1} parent=5 // pred_check
      %p632 = pneg %p631
    $region62: #{discritor_code_forward.1} parent=5 // pred_check_branch
      %634 = sbr.rel (%p632) target = $region64
    $region63: #{discritor_code_forward.1} parent=5 // pred_region
      %s635 = ssub.s32 %s15, 2
      // Predicated region
      $region65: #{discritor_code_forward.1} parent=63 // pred_check
        %p636 = pneg %p238
      $region66: #{discritor_code_forward.1} parent=63 // pred_check_branch
        %638 = sbr.rel (%p636) target = $region68
      $region67: #{discritor_code_forward.1} parent=63 // pred_region
        %p639 = scmp.lt.s32.totalorder %s21, 1
        %s640 = scalar_select %p639, %s21, 1
        %s641 = smul.addr %s640, 8
        %s642 = scalar_lea.vmem %s9, %s641
      $region68: #{discritor_code_forward.1} parent=63 // pred_fallthru
        _
    $region64: #{discritor_code_forward.1} parent=5 // pred_fallthru
      _
  $region6: #{discritor_code_forward.1} parent=0 // loop_footer
    %s19 = sadd.s32 1, %s15
  $region7: #{discritor_code_forward.1} parent=0 // loop_footer_branch
    %14 = sbr.rel target = $region3
  $region8: #{discritor_code_forward.1} parent=0 // loop_exit
    _

</llo_original>
